<compile_context>
chip_gen: v5e
topology: v5e:2x2
jax: 0.10.0
libtpu: 0.0.40
codegen_flags: <defaults>
</compile_context>

<pallas_src>
import functools
import math

import jax
import jax.numpy as jnp
from jax.experimental import pallas as pl
from jax.experimental.pallas import tpu as pltpu


def _attn_kernel(q_ref, k_ref, v_ref, w_ref, b_ref, keep_ref, out_ref, attn_ref,
                 *, inv_keep):
    # q' = q @ W^T + b.  `scale` is already folded into W and b wrapper-side.
    # Contraction over W's last dim -> no in-kernel transpose; bf16 MXU inputs, f32 acc.
    qp = jax.lax.dot_general(
        q_ref[...], w_ref[...],
        dimension_numbers=(((1,), (1,)), ((), ())),
        preferred_element_type=jnp.float32)
    qp = qp + b_ref[...]                                   # (Lq, E) f32

    # logits s = q' @ key^T : contraction over the shared feature dim E (no transpose).
    s = jax.lax.dot_general(
        qp.astype(jnp.bfloat16), k_ref[...],
        dimension_numbers=(((1,), (1,)), ((), ())),
        preferred_element_type=jnp.float32)                # (Lq, Lk) f32

    # Numerically-stable softmax over the last axis, f32; one approximate reciprocal
    # per row (EUP slot), broadcast-multiplied over the tile.
    m = jnp.max(s, axis=-1, keepdims=True)
    e = jnp.exp(s - m)
    inv = pl.reciprocal(jnp.sum(e, axis=-1, keepdims=True), approx=True)
    p = e * inv

    # Train-mode dropout: keep mask is int8 {0,1}; apply the 1/(1-p) scale here.
    p = p * (keep_ref[...].astype(jnp.float32) * inv_keep)

    attn_ref[...] = p
    out_ref[...] = jnp.dot(p.astype(jnp.bfloat16), v_ref[...],
                           preferred_element_type=jnp.float32)


def attention_forward(query, key, value, w_query, b_query, *, scale,
                      dropout_p=0.1, dropout_key=None):
    """query (B,Lq,Dq), key (B,Lk,E), value (B,Lk,Dv), w_query (E,Dq) torch layout, b_query (E,)."""
    B, Lq, Dq = query.shape
    _, Lk, E = key.shape
    _, _, Dv = value.shape
    assert w_query.shape == (E, Dq)

    # Fold the constant scale into the parameter-sized weight/bias (not activations).
    w_s = (w_query.astype(jnp.float32) * scale).astype(jnp.bfloat16)
    b_s = (b_query.astype(jnp.float32) * scale).reshape(1, E)

    # bf16 MXU inputs; f32 accumulation happens in-kernel.
    q_bf = query.astype(jnp.bfloat16)
    k_bf = key.astype(jnp.bfloat16)
    v_bf = value.astype(jnp.bfloat16)

    # Deterministic train-mode dropout mask (F.dropout default training=True), int8 {0,1}.
    if dropout_p > 0.0:
        if dropout_key is None:
            dropout_key = jax.random.PRNGKey(0)
        keep = jax.random.bernoulli(dropout_key, 1.0 - dropout_p, (B, Lq, Lk))
        inv_keep = 1.0 / (1.0 - dropout_p)
    else:
        keep = jnp.ones((B, Lq, Lk), jnp.bool_)
        inv_keep = 1.0
    keep_i8 = keep.astype(jnp.int8)

    kernel = functools.partial(_attn_kernel, inv_keep=float(inv_keep))

    out_shape = (jax.ShapeDtypeStruct((B, Lq, Dv), jnp.float32),
                 jax.ShapeDtypeStruct((B, Lq, Lk), jnp.float32))

    # Grid over the batch dim: the kernel sees only 2D tiles (no reshapes), and the
    # batch axis is a real "parallel" grid axis (second TensorCore on v7x).
    return pl.pallas_call(
        kernel,
        out_shape=out_shape,
        grid=(B,),
        in_specs=[
            pl.BlockSpec((None, Lq, Dq), lambda b: (b, 0, 0)),   # query    (Lq, Dq) bf16
            pl.BlockSpec((None, Lk, E), lambda b: (b, 0, 0)),    # key      (Lk, E)  bf16
            pl.BlockSpec((None, Lk, Dv), lambda b: (b, 0, 0)),   # value    (Lk, Dv) bf16
            pl.BlockSpec((E, Dq), lambda b: (0, 0)),             # W*scale  (E, Dq)  bf16
            pl.BlockSpec((1, E), lambda b: (0, 0)),              # b*scale  (1, E)   f32
            pl.BlockSpec((None, Lq, Lk), lambda b: (b, 0, 0)),   # keep     (Lq, Lk) int8
        ],
        out_specs=(
            pl.BlockSpec((None, Lq, Dv), lambda b: (b, 0, 0)),   # out      (Lq, Dv) f32
            pl.BlockSpec((None, Lq, Lk), lambda b: (b, 0, 0)),   # attn     (Lq, Lk) f32
        ),
        compiler_params=pltpu.CompilerParams(
            dimension_semantics=("parallel",)),
    )(q_bf, k_bf, v_bf, w_s, b_s, keep_i8)


if __name__ == "__main__":
    # Shapes consistent with the module: key (2,4,key_dim), query (2,3,query_dim), value (2,4,value_dim).
    query_dim = 32
    key_dim = 32          # embed_dim must equal key_dim so q' @ key^T is well-formed
    value_dim = 32
    embed_dim = key_dim
    B, Lq, Lk = 2, 3, 4

    root = jax.random.PRNGKey(0)
    kq, kk, kv, kw, kb, kd = jax.random.split(root, 6)

    query = jax.random.normal(kq, (B, Lq, query_dim), dtype=jnp.float32)
    key = jax.random.normal(kk, (B, Lk, key_dim), dtype=jnp.float32)
    value = jax.random.normal(kv, (B, Lk, value_dim), dtype=jnp.float32)

    # Deterministic Linear(query_dim, embed_dim) parameters (torch layout: (out, in)).
    bound = 1.0 / math.sqrt(query_dim)
    w_query = jax.random.uniform(kw, (embed_dim, query_dim), dtype=jnp.float32,
                                 minval=-bound, maxval=bound)
    b_query = jax.random.uniform(kb, (embed_dim,), dtype=jnp.float32,
                                 minval=-bound, maxval=bound)

    scale_factor = math.sqrt(query_dim)   # reference MULTIPLIES by sqrt(query_dim)
    dropout_p = 0.1

    out, attn = attention_forward(query, key, value, w_query, b_query,
                                  scale=scale_factor, dropout_p=dropout_p,
                                  dropout_key=kd)
    jax.block_until_ready((out, attn))

    # Pure-JAX reference mirroring the kernel's numeric choices (same dropout mask,
    # same bf16 MXU inputs / f32 accumulation); loose tolerance covers the in-kernel
    # approximate-reciprocal / exp implementation differences.
    keep = jax.random.bernoulli(kd, 1.0 - dropout_p, (B, Lq, Lk))
    keep_scale = keep.astype(jnp.float32) * (1.0 / (1.0 - dropout_p))
    w_s = (w_query * scale_factor).astype(jnp.bfloat16)
    b_s = (b_query * scale_factor).astype(jnp.float32)
    qp_ref = jnp.einsum('bqd,ed->bqe', query.astype(jnp.bfloat16), w_s,
                        preferred_element_type=jnp.float32) + b_s
    s_ref = jnp.einsum('bqe,bke->bqk', qp_ref.astype(jnp.bfloat16),
                       key.astype(jnp.bfloat16),
                       preferred_element_type=jnp.float32)
    p_ref = jax.nn.softmax(s_ref, axis=-1) * keep_scale
    out_ref = jnp.einsum('bqk,bkd->bqd', p_ref.astype(jnp.bfloat16),
                         value.astype(jnp.bfloat16),
                         preferred_element_type=jnp.float32)

    assert out.shape == (B, Lq, value_dim)
    assert attn.shape == (B, Lq, Lk)
    assert bool(jnp.all(jnp.isfinite(out))) and bool(jnp.all(jnp.isfinite(attn)))
    assert bool(jnp.allclose(attn, p_ref, rtol=5e-2, atol=5e-2))
    assert bool(jnp.allclose(out, out_ref, rtol=5e-2, atol=5e-2))
    print("KERNEL_OK")
</pallas_src>

<mosaic_0001>
module attributes {stable_mosaic.version = 11 : i64} {
  func.func @_attn_kernel(%arg0: i32, %arg1: memref<1x3x32xbf16, #tpu.memory_space<vmem>>, %arg2: memref<1x4x32xbf16, #tpu.memory_space<vmem>>, %arg3: memref<1x4x32xbf16, #tpu.memory_space<vmem>>, %arg4: memref<32x32xbf16, #tpu.memory_space<vmem>>, %arg5: memref<1x32xf32, #tpu.memory_space<vmem>>, %arg6: memref<1x3x4xi8, #tpu.memory_space<vmem>>, %arg7: memref<1x3x32xf32, #tpu.memory_space<vmem>>, %arg8: memref<1x3x4xf32, #tpu.memory_space<vmem>>) attributes {dimension_semantics = [#tpu.dimension_semantics<parallel>], iteration_bounds = array<i64: 2>, scalar_prefetch = 0 : i64, scratch_operands = 0 : i64, tpu.core_type = #tpu.core_type<tc>, window_params = [{transform_indices = @transform_0, window_bounds = array<i64: 1, 3, 32>}, {transform_indices = @transform_1, window_bounds = array<i64: 1, 4, 32>}, {transform_indices = @transform_2, window_bounds = array<i64: 1, 4, 32>}, {pipeline_mode = #tpu.pipeline_mode<synchronous>, transform_indices = @transform_3, window_bounds = array<i64: 32, 32>}, {pipeline_mode = #tpu.pipeline_mode<synchronous>, transform_indices = @transform_4, window_bounds = array<i64: 1, 32>}, {transform_indices = @transform_5, window_bounds = array<i64: 1, 3, 4>}, {transform_indices = @transform_6, window_bounds = array<i64: 1, 3, 32>}, {transform_indices = @transform_7, window_bounds = array<i64: 1, 3, 4>}]} {
    %c0 = arith.constant 0 : index
    %c0_0 = arith.constant 0 : index
    %c0_1 = arith.constant 0 : index
    %0 = vector.load %arg1[%c0, %c0_0, %c0_1] : memref<1x3x32xbf16, #tpu.memory_space<vmem>>, vector<1x3x32xbf16>
    %1 = vector.shape_cast %0 : vector<1x3x32xbf16> to vector<3x32xbf16>
    %c0_2 = arith.constant 0 : index
    %c0_3 = arith.constant 0 : index
    %2 = vector.load %arg4[%c0_2, %c0_3] : memref<32x32xbf16, #tpu.memory_space<vmem>>, vector<32x32xbf16>
    %cst = arith.constant dense<0.000000e+00> : vector<3x32xf32>
    %3 = tpu.matmul %1, %2, %cst {dimension_numbers = #tpu.dot_dimension_numbers<[1], [1], [0], [0], [0, 0, 1, 0], [], []>} : vector<3x32xbf16>, vector<32x32xbf16>, vector<3x32xf32> -> vector<3x32xf32>
    %c0_4 = arith.constant 0 : index
    %c0_5 = arith.constant 0 : index
    %4 = vector.load %arg5[%c0_4, %c0_5] : memref<1x32xf32, #tpu.memory_space<vmem>>, vector<1x32xf32>
    %5 = vector.broadcast %4 : vector<1x32xf32> to vector<3x32xf32>
    %6 = arith.addf %3, %5 : vector<3x32xf32>
    %7 = arith.truncf %6 : vector<3x32xf32> to vector<3x32xbf16>
    %c0_6 = arith.constant 0 : index
    %c0_7 = arith.constant 0 : index
    %c0_8 = arith.constant 0 : index
    %8 = vector.load %arg2[%c0_6, %c0_7, %c0_8] : memref<1x4x32xbf16, #tpu.memory_space<vmem>>, vector<1x4x32xbf16>
    %9 = vector.shape_cast %8 : vector<1x4x32xbf16> to vector<4x32xbf16>
    %cst_9 = arith.constant dense<0.000000e+00> : vector<3x4xf32>
    %10 = tpu.matmul %7, %9, %cst_9 {dimension_numbers = #tpu.dot_dimension_numbers<[1], [1], [0], [0], [0, 0, 1, 0], [], []>} : vector<3x32xbf16>, vector<4x32xbf16>, vector<3x4xf32> -> vector<3x4xf32>
    %cst_10 = arith.constant dense<0xFF800000> : vector<3xf32>
    %11 = vector.multi_reduction <maximumf>, %10, %cst_10 [1] : vector<3x4xf32> to vector<3xf32>
    %12 = vector.shape_cast %11 : vector<3xf32> to vector<3x1xf32>
    %13 = vector.broadcast %12 : vector<3x1xf32> to vector<3x4xf32>
    %14 = arith.subf %10, %13 : vector<3x4xf32>
    %15 = math.exp %14 : vector<3x4xf32>
    %cst_11 = arith.constant dense<0.000000e+00> : vector<3xf32>
    %16 = vector.multi_reduction <add>, %15, %cst_11 [1] : vector<3x4xf32> to vector<3xf32>
    %17 = vector.shape_cast %16 : vector<3xf32> to vector<3x1xf32>
    %18 = tpu.reciprocal %17 {approx = true} : vector<3x1xf32> -> vector<3x1xf32>
    %19 = vector.broadcast %18 : vector<3x1xf32> to vector<3x4xf32>
    %20 = arith.mulf %15, %19 : vector<3x4xf32>
    %c0_12 = arith.constant 0 : index
    %c0_13 = arith.constant 0 : index
    %c0_14 = arith.constant 0 : index
    %21 = vector.load %arg6[%c0_12, %c0_13, %c0_14] : memref<1x3x4xi8, #tpu.memory_space<vmem>>, vector<1x3x4xi8>
    %22 = vector.shape_cast %21 : vector<1x3x4xi8> to vector<3x4xi8>
    %23 = arith.sitofp %22 : vector<3x4xi8> to vector<3x4xf32>
    %cst_15 = arith.constant 1.11111116 : f32
    %24 = vector.broadcast %cst_15 : f32 to vector<3x4xf32>
    %25 = arith.mulf %23, %24 : vector<3x4xf32>
    %26 = arith.mulf %20, %25 : vector<3x4xf32>
    %c0_16 = arith.constant 0 : index
    %c0_17 = arith.constant 0 : index
    %c0_18 = arith.constant 0 : index
    %27 = vector.load %arg8[%c0_16, %c0_17, %c0_18] : memref<1x3x4xf32, #tpu.memory_space<vmem>>, vector<1x3x4xf32>
    %28 = vector.shape_cast %27 : vector<1x3x4xf32> to vector<3x4xf32>
    %29 = vector.shape_cast %26 : vector<3x4xf32> to vector<1x3x4xf32>
    tpu.vector_store %arg8[%c0_16, %c0_17, %c0_18], %29 {strides = array<i32>} : memref<1x3x4xf32, #tpu.memory_space<vmem>>, vector<1x3x4xf32>,
    %30 = arith.truncf %26 : vector<3x4xf32> to vector<3x4xbf16>
    %c0_19 = arith.constant 0 : index
    %c0_20 = arith.constant 0 : index
    %c0_21 = arith.constant 0 : index
    %31 = vector.load %arg3[%c0_19, %c0_20, %c0_21] : memref<1x4x32xbf16, #tpu.memory_space<vmem>>, vector<1x4x32xbf16>
    %32 = vector.shape_cast %31 : vector<1x4x32xbf16> to vector<4x32xbf16>
    %cst_22 = arith.constant dense<0.000000e+00> : vector<3x32xf32>
    %33 = tpu.matmul %30, %32, %cst_22 {dimension_numbers = #tpu.dot_dimension_numbers<[1], [0], [0], [1], [0, 0, 1, 1], [], []>} : vector<3x4xbf16>, vector<4x32xbf16>, vector<3x32xf32> -> vector<3x32xf32>
    %c0_23 = arith.constant 0 : index
    %c0_24 = arith.constant 0 : index
    %c0_25 = arith.constant 0 : index
    %34 = vector.load %arg7[%c0_23, %c0_24, %c0_25] : memref<1x3x32xf32, #tpu.memory_space<vmem>>, vector<1x3x32xf32>
    %35 = vector.shape_cast %34 : vector<1x3x32xf32> to vector<3x32xf32>
    %36 = vector.shape_cast %33 : vector<3x32xf32> to vector<1x3x32xf32>
    tpu.vector_store %arg7[%c0_23, %c0_24, %c0_25], %36 {strides = array<i32>} : memref<1x3x32xf32, #tpu.memory_space<vmem>>, vector<1x3x32xf32>,
    return
  }
  func.func @transform_0(%arg0: i32) -> (i32, i32, i32) {
    %c0_i32 = arith.constant 0 : i32
    %c0_i32_0 = arith.constant 0 : i32
    %c0_i32_1 = arith.constant 0 : i32
    return %arg0, %c0_i32, %c0_i32_0 : i32, i32, i32
  }
  func.func @transform_1(%arg0: i32) -> (i32, i32, i32) {
    %c0_i32 = arith.constant 0 : i32
    %c0_i32_0 = arith.constant 0 : i32
    %c0_i32_1 = arith.constant 0 : i32
    return %arg0, %c0_i32, %c0_i32_0 : i32, i32, i32
  }
  func.func @transform_2(%arg0: i32) -> (i32, i32, i32) {
    %c0_i32 = arith.constant 0 : i32
    %c0_i32_0 = arith.constant 0 : i32
    %c0_i32_1 = arith.constant 0 : i32
    return %arg0, %c0_i32, %c0_i32_0 : i32, i32, i32
  }
  func.func @transform_3(%arg0: i32) -> (i32, i32) {
    %c0_i32 = arith.constant 0 : i32
    %c0_i32_0 = arith.constant 0 : i32
    %c0_i32_1 = arith.constant 0 : i32
    return %c0_i32, %c0_i32_0 : i32, i32
  }
  func.func @transform_4(%arg0: i32) -> (i32, i32) {
    %c0_i32 = arith.constant 0 : i32
    %c0_i32_0 = arith.constant 0 : i32
    %c0_i32_1 = arith.constant 0 : i32
    return %c0_i32, %c0_i32_0 : i32, i32
  }
  func.func @transform_5(%arg0: i32) -> (i32, i32, i32) {
    %c0_i32 = arith.constant 0 : i32
    %c0_i32_0 = arith.constant 0 : i32
    %c0_i32_1 = arith.constant 0 : i32
    return %arg0, %c0_i32, %c0_i32_0 : i32, i32, i32
  }
  func.func @transform_6(%arg0: i32) -> (i32, i32, i32) {
    %c0_i32 = arith.constant 0 : i32
    %c0_i32_0 = arith.constant 0 : i32
    %c0_i32_1 = arith.constant 0 : i32
    return %arg0, %c0_i32, %c0_i32_0 : i32, i32, i32
  }
  func.func @transform_7(%arg0: i32) -> (i32, i32, i32) {
    %c0_i32 = arith.constant 0 : i32
    %c0_i32_0 = arith.constant 0 : i32
    %c0_i32_1 = arith.constant 0 : i32
    return %arg0, %c0_i32, %c0_i32_0 : i32, i32, i32
  }
}

</mosaic_0001>

<llo_original>
// kernel: tpu_custom_call.1
$region0: #{tpu_custom_call.1}
  #allocation0 [shape = 'u32[]', space=smem, size = 0x4, offset = 0x4, fixed_abs, tag = 'smem constant byte address 0x4 - core index']
  #allocation1 [shape = 'u32[72,128]{1,0:T(1,128)}', space=vmem, size = 0x9000, scoped, tag = 'internal scratch']
  %s0 = inlined_call_operand.vmem [shape: bf16[2,3,32], index: 0, kind: input, shape index: {}]
  %s1 = inlined_call_operand.vmem [shape: bf16[2,4,32], index: 1, kind: input, shape index: {}]
  %s2 = inlined_call_operand.vmem [shape: bf16[2,4,32], index: 2, kind: input, shape index: {}]
  %s3 = inlined_call_operand.hbm [shape: bf16[32,32], index: 3, kind: input, shape index: {}]
  %s4 = inlined_call_operand.hbm [shape: f32[1,32], index: 4, kind: input, shape index: {}]
  %s5 = inlined_call_operand.vmem [shape: s8[2,3,4], index: 5, kind: input, shape index: {}]
  %s6 = inlined_call_operand.vmem [shape: f32[2,3,32], index: 6, kind: output, shape index: {0}]
  %s7 = inlined_call_operand.vmem [shape: f32[2,3,4], index: 7, kind: output, shape index: {1}]
  %8 = xla_tuple %s6, %s7
  %s9 = sld [smem:[#allocation0]]
  $region73: #{tpu_custom_call.1} parent=0
    _
  %s11 = ssub.s32 1, %s9
  %s12 = scalar_select 0, %s11, %s9
  $region1: #{tpu_custom_call.1} parent=0
    #allocation2 [shape = 'u8[8192]{0}', space=vmem, size = 0x2000, scoped, tag = 'input window, operand 3, single buffered']
    #allocation3 [shape = 's32[2]{0}', space=sflag, size = 0x8, scoped, tag = 'scoped memory for tpu_custom_call.1']
    #allocation4 [shape = 'u8[512]{0}', space=vmem, size = 0x400, scoped, tag = 'input window, operand 4, single buffered']
    #allocation5 [shape = 's32[1]{0}', space=sflag, size = 0x4, scoped, tag = 'scoped memory for tpu_custom_call.1']
    %13 = vsyncpa [#allocation3], 0
    %14 = vsyncpa [#allocation5], 0
    loop: start=0, step=1, limit=4
    $region2: #{tpu_custom_call.1} parent=1 // loop_pre_header
      _
    $region3: #{tpu_custom_call.1} parent=1 // loop_header
      %s16 = sphi 0, %s20
      %p17 = scmp.ge.s32.totalorder %s16, 4
      %s26 = sphi 0, %s28
      %s29 = sphi 0, %s26
      %s30 = sphi 0, %s29
      %s46 = sphi 0, %s30
      %s52 = sphi 0, %s54
      %s55 = sphi 0, %s52
      %s56 = sphi 0, %s55
      %s72 = sphi 0, %s56
      %s78 = sphi 0, %s80
      %s81 = sphi 0, %s78
      %s82 = sphi 0, %s81
      %s98 = sphi 0, %s82
      %s102 = sphi 0, %s102
      %s104 = sphi 0, %s102
      %s105 = sphi 0, %s104
      %s119 = sphi 0, %s105
      %s123 = sphi 0, %s123
      %s125 = sphi 0, %s123
      %s126 = sphi 0, %s125
      %s140 = sphi 0, %s126
      %s146 = sphi 0, %s148
      %s149 = sphi 0, %s146
      %s150 = sphi 0, %s149
      %s166 = sphi 0, %s150
      %s172 = sphi 0, %s174
      %s175 = sphi 0, %s172
      %s176 = sphi 0, %s175
      %s192 = sphi 0, %s176
      %s198 = sphi 0, %s200
      %s201 = sphi 0, %s198
      %s202 = sphi 0, %s201
      %s218 = sphi 0, %s202
    $region4: #{tpu_custom_call.1} parent=1 // loop_header_branch
      %19 = sbr.rel (%p17) target = $region8
    $region5: #{tpu_custom_call.1} parent=1 // loop_body
      %s21 = ssub.s32 %s16, 1
      %s22 = ssub.s32 %s16, 2
      %s23 = sadd.s32 %s16, 1
      %s24 = ssub.s32 %s16, %s23
      %p25 = scmp.eq.s32.totalorder %s24, 0
      %s27 = sadd.s32 %s26, 1
      %s28 = scalar_select %p25, %s26, %s27
      %p31 = pneg %p25
      %p32 = scmp.eq.s32.totalorder %s16, 1
      %p33 = por %p31, %p32
      %p34 = scmp.ne.s32.totalorder %s26, %s29
      %p35 = scmp.eq.s32.totalorder %s16, 0
      %p36 = por %p34, %p35
      %p37 = scmp.ne.s32.totalorder %s26, %s29
      %p38 = scmp.eq.s32.totalorder %s21, 1
      %p39 = por %p37, %p38
      %p40 = scmp.ne.s32.totalorder %s29, %s30
      %p41 = scmp.eq.s32.totalorder %s21, 0
      %p42 = por %p40, %p41
      %p43 = scmp.ne.s32.totalorder %s29, %s30
      %p44 = scmp.eq.s32.totalorder %s22, 1
      %p45 = por %p43, %p44
      %p47 = scmp.ne.s32.totalorder %s30, %s46
      %p48 = scmp.eq.s32.totalorder %s22, 0
      %p49 = por %p47, %p48
      %s50 = ssub.s32 %s16, %s23
      %p51 = scmp.eq.s32.totalorder %s50, 0
      %s53 = sadd.s32 %s52, 1
      %s54 = scalar_select %p51, %s52, %s53
      %p57 = pneg %p51
      %p58 = scmp.eq.s32.totalorder %s16, 1
      %p59 = por %p57, %p58
      %p60 = scmp.ne.s32.totalorder %s52, %s55
      %p61 = scmp.eq.s32.totalorder %s16, 0
      %p62 = por %p60, %p61
      %p63 = scmp.ne.s32.totalorder %s52, %s55
      %p64 = scmp.eq.s32.totalorder %s21, 1
      %p65 = por %p63, %p64
      %p66 = scmp.ne.s32.totalorder %s55, %s56
      %p67 = scmp.eq.s32.totalorder %s21, 0
      %p68 = por %p66, %p67
      %p69 = scmp.ne.s32.totalorder %s55, %s56
      %p70 = scmp.eq.s32.totalorder %s22, 1
      %p71 = por %p69, %p70
      %p73 = scmp.ne.s32.totalorder %s56, %s72
      %p74 = scmp.eq.s32.totalorder %s22, 0
      %p75 = por %p73, %p74
      %s76 = ssub.s32 %s16, %s23
      %p77 = scmp.eq.s32.totalorder %s76, 0
      %s79 = sadd.s32 %s78, 1
      %s80 = scalar_select %p77, %s78, %s79
      %p83 = pneg %p77
      %p84 = scmp.eq.s32.totalorder %s16, 1
      %p85 = por %p83, %p84
      %p86 = scmp.ne.s32.totalorder %s78, %s81
      %p87 = scmp.eq.s32.totalorder %s16, 0
      %p88 = por %p86, %p87
      %p89 = scmp.ne.s32.totalorder %s78, %s81
      %p90 = scmp.eq.s32.totalorder %s21, 1
      %p91 = por %p89, %p90
      %p92 = scmp.ne.s32.totalorder %s81, %s82
      %p93 = scmp.eq.s32.totalorder %s21, 0
      %p94 = por %p92, %p93
      %p95 = scmp.ne.s32.totalorder %s81, %s82
      %p96 = scmp.eq.s32.totalorder %s22, 1
      %p97 = por %p95, %p96
      %p99 = scmp.ne.s32.totalorder %s82, %s98
      %p100 = scmp.eq.s32.totalorder %s22, 0
      %p101 = por %p99, %p100
      %s103 = sadd.s32 %s102, 1
      %p106 = scmp.eq.s32.totalorder %s16, 1
      %p107 = scmp.ne.s32.totalorder %s102, %s104
      %p108 = scmp.eq.s32.totalorder %s16, 0
      %p109 = por %p107, %p108
      %p110 = scmp.ne.s32.totalorder %s102, %s104
      %p111 = scmp.eq.s32.totalorder %s21, 1
      %p112 = por %p110, %p111
      %p113 = scmp.ne.s32.totalorder %s104, %s105
      %p114 = scmp.eq.s32.totalorder %s21, 0
      %p115 = por %p113, %p114
      %p116 = scmp.ne.s32.totalorder %s104, %s105
      %p117 = scmp.eq.s32.totalorder %s22, 1
      %p118 = por %p116, %p117
      %p120 = scmp.ne.s32.totalorder %s105, %s119
      %p121 = scmp.eq.s32.totalorder %s22, 0
      %p122 = por %p120, %p121
      %s124 = sadd.s32 %s123, 1
      %p127 = scmp.eq.s32.totalorder %s16, 1
      %p128 = scmp.ne.s32.totalorder %s123, %s125
      %p129 = scmp.eq.s32.totalorder %s16, 0
      %p130 = por %p128, %p129
      %p131 = scmp.ne.s32.totalorder %s123, %s125
      %p132 = scmp.eq.s32.totalorder %s21, 1
      %p133 = por %p131, %p132
      %p134 = scmp.ne.s32.totalorder %s125, %s126
      %p135 = scmp.eq.s32.totalorder %s21, 0
      %p136 = por %p134, %p135
      %p137 = scmp.ne.s32.totalorder %s125, %s126
      %p138 = scmp.eq.s32.totalorder %s22, 1
      %p139 = por %p137, %p138
      %p141 = scmp.ne.s32.totalorder %s126, %s140
      %p142 = scmp.eq.s32.totalorder %s22, 0
      %p143 = por %p141, %p142
      %s144 = ssub.s32 %s16, %s23
      %p145 = scmp.eq.s32.totalorder %s144, 0
      %s147 = sadd.s32 %s146, 1
      %s148 = scalar_select %p145, %s146, %s147
      %p151 = pneg %p145
      %p152 = scmp.eq.s32.totalorder %s16, 1
      %p153 = por %p151, %p152
      %p154 = scmp.ne.s32.totalorder %s146, %s149
      %p155 = scmp.eq.s32.totalorder %s16, 0
      %p156 = por %p154, %p155
      %p157 = scmp.ne.s32.totalorder %s146, %s149
      %p158 = scmp.eq.s32.totalorder %s21, 1
      %p159 = por %p157, %p158
      %p160 = scmp.ne.s32.totalorder %s149, %s150
      %p161 = scmp.eq.s32.totalorder %s21, 0
      %p162 = por %p160, %p161
      %p163 = scmp.ne.s32.totalorder %s149, %s150
      %p164 = scmp.eq.s32.totalorder %s22, 1
      %p165 = por %p163, %p164
      %p167 = scmp.ne.s32.totalorder %s150, %s166
      %p168 = scmp.eq.s32.totalorder %s22, 0
      %p169 = por %p167, %p168
      %s170 = ssub.s32 %s16, %s23
      %p171 = scmp.eq.s32.totalorder %s170, 0
      %s173 = sadd.s32 %s172, 1
      %s174 = scalar_select %p171, %s172, %s173
      %p177 = pneg %p171
      %p178 = scmp.eq.s32.totalorder %s16, 1
      %p179 = por %p177, %p178
      %p180 = scmp.ne.s32.totalorder %s172, %s175
      %p181 = scmp.eq.s32.totalorder %s16, 0
      %p182 = por %p180, %p181
      %p183 = scmp.ne.s32.totalorder %s172, %s175
      %p184 = scmp.eq.s32.totalorder %s21, 1
      %p185 = por %p183, %p184
      %p186 = scmp.ne.s32.totalorder %s175, %s176
      %p187 = scmp.eq.s32.totalorder %s21, 0
      %p188 = por %p186, %p187
      %p189 = scmp.ne.s32.totalorder %s175, %s176
      %p190 = scmp.eq.s32.totalorder %s22, 1
      %p191 = por %p189, %p190
      %p193 = scmp.ne.s32.totalorder %s176, %s192
      %p194 = scmp.eq.s32.totalorder %s22, 0
      %p195 = por %p193, %p194
      %s196 = ssub.s32 %s16, %s23
      %p197 = scmp.eq.s32.totalorder %s196, 0
      %s199 = sadd.s32 %s198, 1
      %s200 = scalar_select %p197, %s198, %s199
      %p203 = pneg %p197
      %p204 = scmp.eq.s32.totalorder %s16, 1
      %p205 = por %p203, %p204
      %p206 = scmp.ne.s32.totalorder %s198, %s201
      %p207 = scmp.eq.s32.totalorder %s16, 0
      %p208 = por %p206, %p207
      %p209 = scmp.ne.s32.totalorder %s198, %s201
      %p210 = scmp.eq.s32.totalorder %s21, 1
      %p211 = por %p209, %p210
      %p212 = scmp.ne.s32.totalorder %s201, %s202
      %p213 = scmp.eq.s32.totalorder %s21, 0
      %p214 = por %p212, %p213
      %p215 = scmp.ne.s32.totalorder %s201, %s202
      %p216 = scmp.eq.s32.totalorder %s22, 1
      %p217 = por %p215, %p216
      %p219 = scmp.ne.s32.totalorder %s202, %s218
      %p220 = scmp.eq.s32.totalorder %s22, 0
      %p221 = por %p219, %p220
      %p222 = scmp.le.s32.totalorder 1, %s16
      %p223 = scmp.lt.s32.totalorder %s16, 3
      %p224 = pnand %p222, %p223
      %p225 = pneg %p224
      // Predicated region
      $region9: #{tpu_custom_call.1} parent=5 // pred_check
        _
      $region10: #{tpu_custom_call.1} parent=5 // pred_check_branch
        %227 = sbr.rel (%p224) target = $region12
      $region11: #{tpu_custom_call.1} parent=5 // pred_region
        %s228 = ssub.s32 %s16, 1
        // Predicated region
        $region13: #{tpu_custom_call.1} parent=11 // pred_check
          %p229 = pneg %p115
        $region14: #{tpu_custom_call.1} parent=11 // pred_check_branch
          %231 = sbr.rel (%p229) target = $region16
        $region15: #{tpu_custom_call.1} parent=11 // pred_region
          %233 = vsyncadd [#allocation3], 0
          %s234 = sshll.u32 %s3, 4
          %s235 = int_to_ptr.hbm [resolvable:$true] %s234
          %s236 = sshll.u32 [#allocation2], 4
          %s237 = int_to_ptr.vmem [resolvable:$true] %s236
          %242 = dma.hbm_to_vmem [thread:$0]  %s235, 256, %s237, [#allocation3], 64, 64, 4
        $region16: #{tpu_custom_call.1} parent=11 // pred_fallthru
          _
        // Predicated region
        $region17: #{tpu_custom_call.1} parent=11 // pred_check
          %p243 = pneg %p136
        $region18: #{tpu_custom_call.1} parent=11 // pred_check_branch
          %245 = sbr.rel (%p243) target = $region20
        $region19: #{tpu_custom_call.1} parent=11 // pred_region
          %247 = vsyncadd [#allocation5], 0
          %s249 = sshll.u32 %s4, 4
          %s250 = int_to_ptr.hbm [resolvable:$true] %s249
          %s251 = sshll.u32 [#allocation4], 4
          %s252 = int_to_ptr.vmem [resolvable:$true] %s251
          %254 = dma.hbm_to_vmem [thread:$0]  %s250, 16, %s252, [#allocation5]
        $region20: #{tpu_custom_call.1} parent=11 // pred_fallthru
          _
      $region12: #{tpu_custom_call.1} parent=5 // pred_fallthru
        _
      %p255 = scmp.lt.s32.totalorder %s16, 2
      // Predicated region
      $region21: #{tpu_custom_call.1} parent=5 // pred_check
        %p256 = pneg %p255
      $region22: #{tpu_custom_call.1} parent=5 // pred_check_branch
        %258 = sbr.rel (%p256) target = $region24
      $region23: #{tpu_custom_call.1} parent=5 // pred_region
        // Predicated region
        $region25: #{tpu_custom_call.1} parent=23 // pred_check
          %p259 = pneg %p36
        $region26: #{tpu_custom_call.1} parent=23 // pred_check_branch
          %261 = sbr.rel (%p259) target = $region28
        $region27: #{tpu_custom_call.1} parent=23 // pred_region
          %p262 = scmp.lt.s32.totalorder %s16, 1
          %s263 = scalar_select %p262, %s16, 1
          %s264 = smul.addr %s263, 2
          %s265 = scalar_lea.vmem %s0, %s264
        $region28: #{tpu_custom_call.1} parent=23 // pred_fallthru
          _
        // Predicated region
        $region29: #{tpu_custom_call.1} parent=23 // pred_check
          %p266 = pneg %p62
        $region30: #{tpu_custom_call.1} parent=23 // pred_check_branch
          %268 = sbr.rel (%p266) target = $region32
        $region31: #{tpu_custom_call.1} parent=23 // pred_region
          %p269 = scmp.lt.s32.totalorder %s16, 1
          %s270 = scalar_select %p269, %s16, 1
          %s271 = smul.addr %s270, 2
          %s272 = scalar_lea.vmem %s1, %s271
        $region32: #{tpu_custom_call.1} parent=23 // pred_fallthru
          _
        // Predicated region
        $region33: #{tpu_custom_call.1} parent=23 // pred_check
          %p273 = pneg %p88
        $region34: #{tpu_custom_call.1} parent=23 // pred_check_branch
          %275 = sbr.rel (%p273) target = $region36
        $region35: #{tpu_custom_call.1} parent=23 // pred_region
          %p276 = scmp.lt.s32.totalorder %s16, 1
          %s277 = scalar_select %p276, %s16, 1
          %s278 = smul.addr %s277, 2
          %s279 = scalar_lea.vmem %s2, %s278
        $region36: #{tpu_custom_call.1} parent=23 // pred_fallthru
          _
        // Predicated region
        $region37: #{tpu_custom_call.1} parent=23 // pred_check
          %p280 = pneg %p156
        $region38: #{tpu_custom_call.1} parent=23 // pred_check_branch
          %282 = sbr.rel (%p280) target = $region40
        $region39: #{tpu_custom_call.1} parent=23 // pred_region
          %p283 = scmp.lt.s32.totalorder %s16, 1
          %s284 = scalar_select %p283, %s16, 1
          %s285 = scalar_lea.vmem %s5, %s284
        $region40: #{tpu_custom_call.1} parent=23 // pred_fallthru
          _
      $region24: #{tpu_custom_call.1} parent=5 // pred_fallthru
        _
      %p286 = scmp.le.s32.totalorder 1, %s16
      %p287 = scmp.lt.s32.totalorder %s16, 3
      %p288 = pnand %p286, %p287
      %p289 = pneg %p288
      // Predicated region
      $region41: #{tpu_custom_call.1} parent=5 // pred_check
        _
      $region42: #{tpu_custom_call.1} parent=5 // pred_check_branch
        %291 = sbr.rel (%p288) target = $region44
      $region43: #{tpu_custom_call.1} parent=5 // pred_region
        %s292 = ssub.s32 %s16, 1
        // Predicated region
        $region45: #{tpu_custom_call.1} parent=43 // pred_check
          %p293 = pneg %p115
        $region46: #{tpu_custom_call.1} parent=43 // pred_check_branch
          %295 = sbr.rel (%p293) target = $region48
        $region47: #{tpu_custom_call.1} parent=43 // pred_region
          %297 = dma.done [#allocation3], 256
        $region48: #{tpu_custom_call.1} parent=43 // pred_fallthru
          _
        // Predicated region
        $region49: #{tpu_custom_call.1} parent=43 // pred_check
          %p298 = pneg %p136
        $region50: #{tpu_custom_call.1} parent=43 // pred_check_branch
          %300 = sbr.rel (%p298) target = $region52
        $region51: #{tpu_custom_call.1} parent=43 // pred_region
          %302 = dma.done [#allocation5], 16
        $region52: #{tpu_custom_call.1} parent=43 // pred_fallthru
          _
        %p303 = scmp.lt.s32.totalorder %s21, 1
        %s304 = scalar_select %p303, %s21, 1
        %s305 = smul.addr %s304, 2
        %s306 = scalar_lea.vmem %s0, %s305
        %p307 = pneg %p42
        %p308 = pneg %p39
        %p309 = scmp.lt.s32.totalorder %s21, 1
        %s310 = scalar_select %p309, %s21, 1
        %s311 = smul.addr %s310, 2
        %s312 = scalar_lea.vmem %s1, %s311
        %p313 = pneg %p68
        %p314 = pneg %p65
        %p315 = scmp.lt.s32.totalorder %s21, 1
        %s316 = scalar_select %p315, %s21, 1
        %s317 = smul.addr %s316, 2
        %s318 = scalar_lea.vmem %s2, %s317
        %p319 = pneg %p94
        %p320 = pneg %p91
        %p321 = pneg %p115
        %p322 = pneg %p112
        %p323 = pneg %p136
        %p324 = pneg %p133
        %p325 = scmp.lt.s32.totalorder %s21, 1
        %s326 = scalar_select %p325, %s21, 1
        %s327 = scalar_lea.vmem %s5, %s326
        %p328 = pneg %p162
        %p329 = pneg %p159
        %p330 = pneg %p188
        %p331 = pneg %p185
        %p332 = scmp.lt.s32.totalorder %s21, 1
        %s333 = scalar_select %p332, %s21, 1
        %s334 = smul.addr %s333, 4
        %s335 = scalar_lea.vmem %s6, %s334
        %p336 = pneg %p214
        %p337 = pneg %p211
        %p338 = scmp.lt.s32.totalorder %s21, 1
        %s339 = scalar_select %p338, %s21, 1
        %s340 = smul.addr %s339, 4
        %s341 = scalar_lea.vmem %s7, %s340
        %p342 = scmp.lt.s32.totalorder %s21, 1
        %s343 = scalar_select %p342, %s21, 1
        %s344 = smul.addr %s343, 2
        %s345 = scalar_lea.vmem %s0, %s344
        %p346 = scmp.lt.s32.totalorder %s21, 1
        %s347 = scalar_select %p346, %s21, 1
        %s348 = smul.addr %s347, 2
        %s349 = scalar_lea.vmem %s1, %s348
        %p350 = scmp.lt.s32.totalorder %s21, 1
        %s351 = scalar_select %p350, %s21, 1
        %s352 = smul.addr %s351, 2
        %s353 = scalar_lea.vmem %s2, %s352
        %p354 = scmp.lt.s32.totalorder %s21, 1
        %s355 = scalar_select %p354, %s21, 1
        %s356 = scalar_lea.vmem %s5, %s355
        %p357 = scmp.lt.s32.totalorder %s21, 1
        %s358 = scalar_select %p357, %s21, 1
        %s359 = smul.addr %s358, 4
        %s360 = scalar_lea.vmem %s6, %s359
        %p361 = scmp.lt.s32.totalorder %s21, 1
        %s362 = scalar_select %p361, %s21, 1
        %s363 = smul.addr %s362, 4
        %s364 = scalar_lea.vmem %s7, %s363
        %v366 = vld [vmem:[%s345] sm:$0x3]
        %v367 = vld [vmem:[#allocation2] sm:$0xf]
        %v368 = vld [vmem:[#allocation2 + $0x4] sm:$0xf]
        %v369 = vld [vmem:[#allocation2 + $0x8] sm:$0xf]
        %v370 = vld [vmem:[#allocation2 + $0xc] sm:$0xf]
        %v371 = vld [vmem:[#allocation4] sm:$0x1]
        %v373 = vperm.slane %v371, 0
        %v379 = vunpack.c.l.b16 %v367
        %v380 = vunpack.c.l.b16 %v368
        %v381 = vunpack.c.l.b16 %v369
        %v382 = vunpack.c.l.b16 %v370
        %v383 = vpack.c.b16 %v380, %v379
        %v384 = vpack.c.b16 %v382, %v381
        %vm385 = vcmask 261120
        %v387 = vsel %vm385, %v366, 0
        %v390 = vsel %vm385, %v383, 0
        %v393 = vsel %vm385, %v384, 0
        %395 = vmatpush.bf16.xpose.msra.mxu0 0
        %396 = vmatpush.bf16.xpose.msra.mxu0 0
        %397 = vmatpush.bf16.xpose.msra.mxu0 0
        %398 = vmatpush.bf16.xpose.msra.mxu0 0
        %399 = vmatpush.bf16.xpose.msra.mxu0 0
        %400 = vmatpush.bf16.xpose.msra.mxu0 0
        %401 = vmatpush.bf16.xpose.msra.mxu0 %v393
        %402 = vmatpush.bf16.xpose.msra.mxu0 %v390
        %403 = vmatmul.bf16.gmra.mxu0 %v387
        %v404 = vpop.f32.mrf.mxu0
        %v405 = vadd.f32 %v373, %v404
        %v406 = vpop.f32.mrf.mxu0
        %407 = vdwg.mxu0
        %v408 = vpack.c.bf16 %v405, %v405
        %v409 = vld [vmem:[%s349] sm:$0x3]
        %v411 = vsel %vm385, %v408, 0
        %v414 = vsel %vm385, %v409, 0
        %416 = vmatpush.bf16.xpose.msra.mxu0 0
        %417 = vmatpush.bf16.xpose.msra.mxu0 0
        %418 = vmatpush.bf16.xpose.msra.mxu0 0
        %419 = vmatpush.bf16.xpose.msra.mxu0 0
        %420 = vmatpush.bf16.xpose.msra.mxu0 0
        %421 = vmatpush.bf16.xpose.msra.mxu0 0
        %422 = vmatpush.bf16.xpose.msra.mxu0 0
        %423 = vmatpush.bf16.xpose.msra.mxu0 %v414
        %424 = vmatmul.bf16.gmra.mxu0 %v411
        %v425 = vpop.f32.mrf.mxu0
        %v426 = vadd.f32 0.0, %v425
        %v427 = vpop.f32.mrf.mxu0
        %428 = vdwg.mxu0
        %vm429 = vcmask 26624
        %v430 = vsel %vm429, %v426, -inf
        %431 = vmax.xlane.f32.xlu0 %v430
        %v432 = vpop.xlane.xlu0 %431
        %v433 = vsub.f32 %v426, %v432
        %v434 = vmul.f32 %v433, 1.442695
        %v435 = vpow.pop %v434
        %v436 = vsel %vm429, %v435, 0.0
        %437 = vadd.xlane.f32.xlu0 %v436
        %v438 = vpop.xlane.xlu0 %437
        %v439 = vrcp.pop %v438
        %v440 = vmul.f32 %v435, %v439
        %v441 = vld [vmem:[%s356] sm:$0x1]
        %v442 = vunpack.c.0.s8 %v441
        %v443 = vcvt.s32.f32 %v442
        %v444 = vmul.f32 %v443, 1.1111112
        %v445 = vmul.f32 %v440, %v444
        %446 = vst.msk [vmem:[%s364] sm:$0x7] %vm429, %v445
        %v447 = vpack.c.bf16 %v445, %v445
        %v448 = vld [vmem:[%s353] sm:$0x3]
        %vm449 = vcmask 31744
        %v451 = vsel %vm449, %v447, 0
        %vm453 = vcmask 1041408
        %v455 = vsel %vm453, %v448, 0
        %457 = vmatpush.bf16.msra.mxu0 0
        %458 = vmatpush.bf16.msra.mxu0 0
        %459 = vmatpush.bf16.msra.mxu0 0
        %460 = vmatpush.bf16.msra.mxu0 0
        %461 = vmatpush.bf16.msra.mxu0 0
        %462 = vmatpush.bf16.msra.mxu0 0
        %463 = vmatpush.bf16.msra.mxu0 0
        %464 = vmatpush.bf16.msra.mxu0 %v455
        %465 = vmatmul.bf16.gmra.mxu0 %v451
        %v466 = vpop.f32.mrf.mxu0
        %v467 = vadd.f32 0.0, %v466
        %v468 = vpop.f32.mrf.mxu0
        %469 = vdwg.mxu0
        %vm470 = vcmask 256000
        %471 = vst.msk [vmem:[%s360] sm:$0x7] %vm470, %v467
        %p472 = scmp.lt.s32.totalorder %s21, 1
        %s473 = scalar_select %p472, %s21, 1
        %s474 = smul.addr %s473, 4
        %s475 = scalar_lea.vmem %s6, %s474
        %p476 = scmp.lt.s32.totalorder %s21, 1
        %s477 = scalar_select %p476, %s21, 1
        %s478 = smul.addr %s477, 4
        %s479 = scalar_lea.vmem %s7, %s478
        // Predicated region
        $region53: #{tpu_custom_call.1} parent=43 // pred_check
          %p480 = pneg %p185
        $region54: #{tpu_custom_call.1} parent=43 // pred_check_branch
          %482 = sbr.rel (%p480) target = $region56
        $region55: #{tpu_custom_call.1} parent=43 // pred_region
          _
        $region56: #{tpu_custom_call.1} parent=43 // pred_fallthru
          _
        // Predicated region
        $region57: #{tpu_custom_call.1} parent=43 // pred_check
          %p483 = pneg %p211
        $region58: #{tpu_custom_call.1} parent=43 // pred_check_branch
          %485 = sbr.rel (%p483) target = $region60
        $region59: #{tpu_custom_call.1} parent=43 // pred_region
          _
        $region60: #{tpu_custom_call.1} parent=43 // pred_fallthru
          _
      $region44: #{tpu_custom_call.1} parent=5 // pred_fallthru
        _
      %p486 = scmp.le.s32.totalorder 2, %s16
      // Predicated region
      $region61: #{tpu_custom_call.1} parent=5 // pred_check
        %p487 = pneg %p486
      $region62: #{tpu_custom_call.1} parent=5 // pred_check_branch
        %489 = sbr.rel (%p487) target = $region64
      $region63: #{tpu_custom_call.1} parent=5 // pred_region
        %s490 = ssub.s32 %s16, 2
        // Predicated region
        $region65: #{tpu_custom_call.1} parent=63 // pred_check
          %p491 = pneg %p191
        $region66: #{tpu_custom_call.1} parent=63 // pred_check_branch
          %493 = sbr.rel (%p491) target = $region68
        $region67: #{tpu_custom_call.1} parent=63 // pred_region
          %p494 = scmp.lt.s32.totalorder %s22, 1
          %s495 = scalar_select %p494, %s22, 1
          %s496 = smul.addr %s495, 4
          %s497 = scalar_lea.vmem %s6, %s496
        $region68: #{tpu_custom_call.1} parent=63 // pred_fallthru
          _
        // Predicated region
        $region69: #{tpu_custom_call.1} parent=63 // pred_check
          %p498 = pneg %p217
        $region70: #{tpu_custom_call.1} parent=63 // pred_check_branch
          %500 = sbr.rel (%p498) target = $region72
        $region71: #{tpu_custom_call.1} parent=63 // pred_region
          %p501 = scmp.lt.s32.totalorder %s22, 1
          %s502 = scalar_select %p501, %s22, 1
          %s503 = smul.addr %s502, 4
          %s504 = scalar_lea.vmem %s7, %s503
        $region72: #{tpu_custom_call.1} parent=63 // pred_fallthru
          _
      $region64: #{tpu_custom_call.1} parent=5 // pred_fallthru
        _
    $region6: #{tpu_custom_call.1} parent=1 // loop_footer
      %s20 = sadd.s32 1, %s16
    $region7: #{tpu_custom_call.1} parent=1 // loop_footer_branch
      %15 = sbr.rel target = $region3
    $region8: #{tpu_custom_call.1} parent=1 // loop_exit
      _
    %505 = vsyncpa [#allocation3], 1
    %s506 = scalar_lea.sflag [#allocation3], 1
    %507 = vsyncpa %s506, 1
    %508 = vsyncpa [#allocation5], 1

</llo_original>
